<compile_context>
chip_gen: v7x
topology: tpu7x:2x2x1
jax: 0.10.0
libtpu: 0.0.40
codegen_flags: <defaults>
</compile_context>

<pallas_src>
import functools

import numpy as np
import jax
import jax.numpy as jnp
from jax.experimental import pallas as pl
from jax.experimental.pallas import tpu as pltpu


# ----------------------------------------------------------------------------
# Synthetic hyperparameters (mirror NeuralBanditModelDWS.__init__ shape logic)
# ----------------------------------------------------------------------------
class HParams:
    state_based_value = False
    no_embedding = False
    output_features = 16          # F : clf in_features / DWS output feature dim
    dim_hidden = 32               # H : DWSModel hidden feature dim
    n_hidden = 2
    reduction = "mean"
    n_fc_layers = 1
    n_out_fc = 1
    set_layer = "sab"
    do_rate = 0.0
    add_bn = False
    obs_dim = 8
    layers_size = [64, 64]
    # weight space of a small policy MLP: obs(8) -> 16 -> act(4)
    weight_shapes = [(8, 16), (16, 4)]
    bias_shapes = [(16,), (4,)]


HP = HParams()
TB_MAX = 32              # max policies folded into one grid step (TB*S = 128 lanes out)
CHUNK = 512              # inner lane-chunk width when TB*N is large (vreg pressure cap)
SINGLE_CHUNK_MAX = 1024  # process the whole tile in one shot if TB*N fits in this


def _round_up(x, m):
    return ((x + m - 1) // m) * m


# ----------------------------------------------------------------------------
# Pallas kernel: fused DWS per-entry feature MLP + invariant set pooling for a
# tile of TB policies folded along the lane axis.
# Orientation: feature channels on sublanes, weight-space entries on lanes.
# ----------------------------------------------------------------------------
def dws_bandit_kernel(x_ref, seg_ref, cols_ref, w2_ref, w3_ref, mu_ref,
                      *, n_chunks, chunk):
    F = w3_ref.shape[0]
    TS = seg_ref.shape[-1]

    # Tiny resident parameters, hoisted out of the lane-chunk loop.
    w1 = cols_ref[:, 0:1]                 # [H, 1] f32
    b1 = cols_ref[:, 1:2]                 # [H, 1] f32
    b2 = cols_ref[:, 2:3]                 # [H, 1] f32
    b3 = cols_ref[0:F, 3:4]               # [F, 1] f32
    w2t = w2_ref[...]                     # [H, H] bf16 (MXU operand)
    w3t = w3_ref[...]                     # [F, H] bf16 (MXU operand)

    def chunk_step(xc, segc, acc):
        # xc: [1, chunk] bf16, segc: [chunk, TS] bf16 (0/1), acc: [F, TS] f32
        xf = xc.astype(jnp.float32)
        h = jnp.maximum(w1 * xf + b1, 0.0)                               # [H, chunk] f32
        h = jnp.maximum(
            jnp.dot(w2t, h.astype(jnp.bfloat16),
                    preferred_element_type=jnp.float32) + b2, 0.0)       # [H, chunk] f32
        f = (jnp.dot(w3t, h.astype(jnp.bfloat16),
                     preferred_element_type=jnp.float32) + b3)           # [F, chunk] f32
        # Set pooling (sum) via the block-diagonal 0/1 indicator; the 1/|set|
        # mean scale is applied on the f32 result outside the kernel.
        return acc + jnp.dot(f.astype(jnp.bfloat16), segc,
                             preferred_element_type=jnp.float32)         # [F, TS] f32

    acc0 = jnp.zeros((F, TS), jnp.float32)
    if n_chunks == 1:
        acc = chunk_step(x_ref[0], seg_ref[...], acc0)
    else:
        def body(c, acc):
            start = pl.multiple_of(c * chunk, 128)
            return chunk_step(x_ref[0, :, pl.ds(start, chunk)],
                              seg_ref[pl.ds(start, chunk), :], acc)
        acc = jax.lax.fori_loop(0, n_chunks, body, acc0, unroll=True)

    mu_ref[0] = acc


# ----------------------------------------------------------------------------
# Parameters (deterministic init)
# ----------------------------------------------------------------------------
def build_params(hp, key):
    H, F = hp.dim_hidden, hp.output_features
    S = len(hp.weight_shapes) + len(hp.bias_shapes)
    latent_dim = S * F
    ks = jax.random.split(key, 7)
    params = dict(
        w1=jax.random.normal(ks[0], (1, H), jnp.float32) * 0.5,
        b1=jax.random.normal(ks[1], (1, H), jnp.float32) * 0.1,
        w2=jax.random.normal(ks[2], (H, H), jnp.float32) / np.sqrt(H),
        b2=jax.random.normal(ks[3], (1, H), jnp.float32) * 0.1,
        w3=jax.random.normal(ks[4], (H, F), jnp.float32) / np.sqrt(H),
        b3=jax.random.normal(ks[5], (1, F), jnp.float32) * 0.1,
        wclf=jax.random.normal(ks[6], (latent_dim,), jnp.float32) / np.sqrt(latent_dim),
    )
    return params, latent_dim


# ----------------------------------------------------------------------------
# Wrapper: flatten policy weight space, batch-fold TB policies per grid step,
# build the block-diagonal pooling indicator, call the kernel, apply the mean
# scaling + clf head in XLA.
# ----------------------------------------------------------------------------
def neural_bandit_forward(state, policy, params, hp=HP,
                          tb_max=TB_MAX, chunk=CHUNK, single_chunk_max=SINGLE_CHUNK_MAX):
    del state  # forward() ignores the state branch on the no_embedding=False path
    weights, biases = policy
    B = weights[0].shape[0]
    H, F = hp.dim_hidden, hp.output_features
    seg_sizes = ([int(np.prod(s)) for s in hp.weight_shapes]
                 + [int(np.prod(s)) for s in hp.bias_shapes])
    S = len(seg_sizes)
    N = sum(seg_sizes)

    # ---- batch folding: TB policies packed along the lane axis per grid step ----
    TB = max(1, min(tb_max, B))
    G = -(-B // TB)
    B_pad = G * TB

    LN = TB * N
    if LN <= single_chunk_max:
        L = _round_up(LN, 128)
        n_chunks, chunk_sz = 1, L
    else:
        L = _round_up(LN, chunk)
        n_chunks, chunk_sz = L // chunk, chunk

    # concat_weights ordering: all weights flattened, then all biases (per element)
    flat = jnp.concatenate(
        [w.reshape(B, -1) for w in weights] + [b.reshape(B, -1) for b in biases],
        axis=1).astype(jnp.float32)                                    # [B, N]
    flat = jnp.pad(flat, ((0, B_pad - B), (0, 0)))
    x = flat.reshape(G, TB * N)
    x = jnp.pad(x, ((0, 0), (0, L - LN)))
    x = x.astype(jnp.bfloat16).reshape(G, 1, L)                        # lane-dense bf16 stream

    # block-diagonal 0/1 set-membership indicator (exact in bf16); padded rows stay 0
    TS = TB * S
    seg_np = np.zeros((L, TS), dtype=np.float32)
    for t in range(TB):
        off = t * N
        for s, sz in enumerate(seg_sizes):
            seg_np[off:off + sz, t * S + s] = 1.0
            off += sz
    seg = jnp.asarray(seg_np, dtype=jnp.bfloat16)

    # consolidated tiny params: [w1 | b1 | b2 | b3(zero-padded to H)] as f32 columns
    b3_col = jnp.zeros((H,), jnp.float32).at[:F].set(params["b3"][0])
    cols = jnp.stack([params["w1"][0], params["b1"][0], params["b2"][0], b3_col],
                     axis=1)                                           # [H, 4] f32
    w2t = params["w2"].T.astype(jnp.bfloat16)                          # [H, H] bf16
    w3t = params["w3"].T.astype(jnp.bfloat16)                          # [F, H] bf16

    const2 = lambda g: (0, 0)
    mu_t = pl.pallas_call(
        functools.partial(dws_bandit_kernel, n_chunks=n_chunks, chunk=chunk_sz),
        grid=(G,),
        in_specs=[
            pl.BlockSpec((1, 1, L), lambda g: (g, 0, 0)),   # x   : TB policies on lanes
            pl.BlockSpec((L, TS), const2),                  # seg : resident block-diag 0/1
            pl.BlockSpec((H, 4), const2),                   # packed w1/b1/b2/b3 columns
            pl.BlockSpec((H, H), const2),                   # w2^T (bf16)
            pl.BlockSpec((F, H), const2),                   # w3^T (bf16)
        ],
        out_specs=pl.BlockSpec((1, F, TS), lambda g: (g, 0, 0)),
        out_shape=jax.ShapeDtypeStruct((G, F, TS), jnp.float32),
        compiler_params=pltpu.CompilerParams(
            dimension_semantics=("parallel",)),
    )(x, seg, cols, w2t, w3t)

    # unfold: [G, F, TB*S] -> [B, S*F] (set-major, feature-minor); apply 1/|set| scale
    mu_raw = (mu_t.reshape(G, F, TB, S)
                  .transpose(0, 2, 3, 1)
                  .reshape(B_pad, S * F)[:B])
    inv = jnp.asarray(np.repeat(1.0 / np.asarray(seg_sizes, np.float32), F))
    mu = mu_raw * inv                                                   # [B, S*F]
    # clf last layer (Linear(latent_dim, 1, bias=False)) — trivial, done in XLA
    mean_value = mu @ params["wclf"]                                    # [B]
    return mean_value, mu


# ----------------------------------------------------------------------------
# Pure-JAX reference (same math; optionally mirrors the bf16 streaming/MXU casts)
# ----------------------------------------------------------------------------
def ref_forward(policy, params, hp=HP, mirror_bf16=True):
    weights, biases = policy
    B = weights[0].shape[0]
    seg_sizes = ([int(np.prod(s)) for s in hp.weight_shapes]
                 + [int(np.prod(s)) for s in hp.bias_shapes])
    flat = jnp.concatenate(
        [w.reshape(B, -1) for w in weights] + [b.reshape(B, -1) for b in biases], axis=1)
    x = flat[..., None].astype(jnp.float32)                            # [B, N, 1]
    if mirror_bf16:
        x = x.astype(jnp.bfloat16).astype(jnp.float32)
        w2 = params["w2"].astype(jnp.bfloat16).astype(jnp.float32)
        w3 = params["w3"].astype(jnp.bfloat16).astype(jnp.float32)
    else:
        w2, w3 = params["w2"], params["w3"]
    h = jax.nn.relu(x * params["w1"] + params["b1"])
    if mirror_bf16:
        h = h.astype(jnp.bfloat16).astype(jnp.float32)
    h = jax.nn.relu(h @ w2 + params["b2"])
    if mirror_bf16:
        h = h.astype(jnp.bfloat16).astype(jnp.float32)
    f = h @ w3 + params["b3"]                                          # [B, N, F]
    if mirror_bf16:
        f = f.astype(jnp.bfloat16).astype(jnp.float32)
    pooled, off = [], 0
    for sz in seg_sizes:
        pooled.append(f[:, off:off + sz].mean(axis=1))
        off += sz
    mu = jnp.concatenate(pooled, axis=-1)                              # [B, S*F]
    mean_value = mu @ params["wclf"]                                   # [B]
    return mean_value, mu


if __name__ == "__main__":
    hp = HP
    B = 2
    key = jax.random.PRNGKey(0)
    k_state, kw0, kw1, kb0, kb1 = jax.random.split(key, 5)

    state = jax.random.normal(k_state, (B, hp.obs_dim), jnp.float32)
    policy = (
        (jax.random.normal(kw0, (B,) + hp.weight_shapes[0] + (1,), jnp.float32) * 0.3,
         jax.random.normal(kw1, (B,) + hp.weight_shapes[1] + (1,), jnp.float32) * 0.3),
        (jax.random.normal(kb0, (B,) + hp.bias_shapes[0] + (1,), jnp.float32) * 0.1,
         jax.random.normal(kb1, (B,) + hp.bias_shapes[1] + (1,), jnp.float32) * 0.1),
    )

    params, latent_dim = build_params(hp, jax.random.PRNGKey(42))

    mean_value, mu = neural_bandit_forward(state, policy, params, hp)
    mean_value = jax.block_until_ready(mean_value)
    mu = jax.block_until_ready(mu)

    # Tight check against a reference that mirrors the bf16 streaming/MXU casts.
    mv_ref, mu_ref_ = ref_forward(policy, params, hp, mirror_bf16=True)
    np.testing.assert_allclose(np.asarray(mean_value), np.asarray(mv_ref), rtol=1e-3, atol=1e-3)
    np.testing.assert_allclose(np.asarray(mu), np.asarray(mu_ref_), rtol=1e-3, atol=1e-3)

    # Loose check against the full-f32 module math (bf16 quantization tolerance).
    mv_f32, mu_f32 = ref_forward(policy, params, hp, mirror_bf16=False)
    np.testing.assert_allclose(np.asarray(mean_value), np.asarray(mv_f32), rtol=5e-2, atol=5e-2)
    np.testing.assert_allclose(np.asarray(mu), np.asarray(mu_f32), rtol=5e-2, atol=5e-2)

    print("KERNEL_OK")
</pallas_src>

<mosaic_0001>
module attributes {stable_mosaic.version = 11 : i64} {
  func.func @dws_bandit_kernel(%arg0: i32, %arg1: memref<1x1x512xbf16, #tpu.memory_space<vmem>>, %arg2: memref<512x8xbf16, #tpu.memory_space<vmem>>, %arg3: memref<32x4xf32, #tpu.memory_space<vmem>>, %arg4: memref<32x32xbf16, #tpu.memory_space<vmem>>, %arg5: memref<16x32xbf16, #tpu.memory_space<vmem>>, %arg6: memref<1x16x8xf32, #tpu.memory_space<vmem>>) attributes {dimension_semantics = [#tpu.dimension_semantics<parallel>], iteration_bounds = array<i64: 1>, scalar_prefetch = 0 : i64, scratch_operands = 0 : i64, tpu.core_type = #tpu.core_type<tc>, window_params = [{transform_indices = @transform_0, window_bounds = array<i64: 1, 1, 512>}, {pipeline_mode = #tpu.pipeline_mode<synchronous>, transform_indices = @transform_1, window_bounds = array<i64: 512, 8>}, {pipeline_mode = #tpu.pipeline_mode<synchronous>, transform_indices = @transform_2, window_bounds = array<i64: 32, 4>}, {pipeline_mode = #tpu.pipeline_mode<synchronous>, transform_indices = @transform_3, window_bounds = array<i64: 32, 32>}, {pipeline_mode = #tpu.pipeline_mode<synchronous>, transform_indices = @transform_4, window_bounds = array<i64: 16, 32>}, {transform_indices = @transform_5, window_bounds = array<i64: 1, 16, 8>}]} {
    %c0 = arith.constant 0 : index
    %c0_0 = arith.constant 0 : index
    %0 = vector.load %arg3[%c0, %c0_0] : memref<32x4xf32, #tpu.memory_space<vmem>>, vector<32x1xf32>
    %c0_1 = arith.constant 0 : index
    %c1 = arith.constant 1 : index
    %1 = vector.load %arg3[%c0_1, %c1] : memref<32x4xf32, #tpu.memory_space<vmem>>, vector<32x1xf32>
    %c0_2 = arith.constant 0 : index
    %c2 = arith.constant 2 : index
    %2 = vector.load %arg3[%c0_2, %c2] : memref<32x4xf32, #tpu.memory_space<vmem>>, vector<32x1xf32>
    %c0_3 = arith.constant 0 : index
    %c3 = arith.constant 3 : index
    %3 = vector.load %arg3[%c0_3, %c3] : memref<32x4xf32, #tpu.memory_space<vmem>>, vector<16x1xf32>
    %c0_4 = arith.constant 0 : index
    %c0_5 = arith.constant 0 : index
    %4 = vector.load %arg4[%c0_4, %c0_5] : memref<32x32xbf16, #tpu.memory_space<vmem>>, vector<32x32xbf16>
    %c0_6 = arith.constant 0 : index
    %c0_7 = arith.constant 0 : index
    %5 = vector.load %arg5[%c0_6, %c0_7] : memref<16x32xbf16, #tpu.memory_space<vmem>>, vector<16x32xbf16>
    %cst = arith.constant 0.000000e+00 : f32
    %6 = vector.broadcast %cst : f32 to vector<16x8xf32>
    %c0_8 = arith.constant 0 : index
    %c0_9 = arith.constant 0 : index
    %c0_10 = arith.constant 0 : index
    %7 = vector.load %arg1[%c0_8, %c0_9, %c0_10] : memref<1x1x512xbf16, #tpu.memory_space<vmem>>, vector<1x1x512xbf16>
    %8 = vector.shape_cast %7 : vector<1x1x512xbf16> to vector<1x512xbf16>
    %c0_11 = arith.constant 0 : index
    %c0_12 = arith.constant 0 : index
    %9 = vector.load %arg2[%c0_11, %c0_12] : memref<512x8xbf16, #tpu.memory_space<vmem>>, vector<512x8xbf16>
    %10 = arith.extf %8 : vector<1x512xbf16> to vector<1x512xf32>
    %11 = vector.broadcast %0 : vector<32x1xf32> to vector<32x512xf32>
    %12 = vector.broadcast %10 : vector<1x512xf32> to vector<32x512xf32>
    %13 = arith.mulf %11, %12 : vector<32x512xf32>
    %14 = vector.broadcast %1 : vector<32x1xf32> to vector<32x512xf32>
    %15 = arith.addf %13, %14 : vector<32x512xf32>
    %cst_13 = arith.constant 0.000000e+00 : f32
    %16 = vector.broadcast %cst_13 : f32 to vector<32x512xf32>
    %17 = arith.maximumf %15, %16 : vector<32x512xf32>
    %18 = arith.truncf %17 : vector<32x512xf32> to vector<32x512xbf16>
    %cst_14 = arith.constant dense<0.000000e+00> : vector<32x512xf32>
    %19 = tpu.matmul %4, %18, %cst_14 {dimension_numbers = #tpu.dot_dimension_numbers<[1], [0], [0], [1], [0, 0, 1, 1], [], []>} : vector<32x32xbf16>, vector<32x512xbf16>, vector<32x512xf32> -> vector<32x512xf32>
    %20 = vector.broadcast %2 : vector<32x1xf32> to vector<32x512xf32>
    %21 = arith.addf %19, %20 : vector<32x512xf32>
    %cst_15 = arith.constant 0.000000e+00 : f32
    %22 = vector.broadcast %cst_15 : f32 to vector<32x512xf32>
    %23 = arith.maximumf %21, %22 : vector<32x512xf32>
    %24 = arith.truncf %23 : vector<32x512xf32> to vector<32x512xbf16>
    %cst_16 = arith.constant dense<0.000000e+00> : vector<16x512xf32>
    %25 = tpu.matmul %5, %24, %cst_16 {dimension_numbers = #tpu.dot_dimension_numbers<[1], [0], [0], [1], [0, 0, 1, 1], [], []>} : vector<16x32xbf16>, vector<32x512xbf16>, vector<16x512xf32> -> vector<16x512xf32>
    %26 = vector.broadcast %3 : vector<16x1xf32> to vector<16x512xf32>
    %27 = arith.addf %25, %26 : vector<16x512xf32>
    %28 = arith.truncf %27 : vector<16x512xf32> to vector<16x512xbf16>
    %cst_17 = arith.constant dense<0.000000e+00> : vector<16x8xf32>
    %29 = tpu.matmul %28, %9, %cst_17 {dimension_numbers = #tpu.dot_dimension_numbers<[1], [0], [0], [1], [0, 0, 1, 1], [], []>} : vector<16x512xbf16>, vector<512x8xbf16>, vector<16x8xf32> -> vector<16x8xf32>
    %30 = arith.addf %6, %29 : vector<16x8xf32>
    %c0_18 = arith.constant 0 : index
    %c0_19 = arith.constant 0 : index
    %c0_20 = arith.constant 0 : index
    %31 = vector.load %arg6[%c0_18, %c0_19, %c0_20] : memref<1x16x8xf32, #tpu.memory_space<vmem>>, vector<1x16x8xf32>
    %32 = vector.shape_cast %31 : vector<1x16x8xf32> to vector<16x8xf32>
    %33 = vector.shape_cast %30 : vector<16x8xf32> to vector<1x16x8xf32>
    tpu.vector_store %arg6[%c0_18, %c0_19, %c0_20], %33 {strides = array<i32>} : memref<1x16x8xf32, #tpu.memory_space<vmem>>, vector<1x16x8xf32>,
    return
  }
  func.func @transform_0(%arg0: i32) -> (i32, i32, i32) {
    %c0_i32 = arith.constant 0 : i32
    %c0_i32_0 = arith.constant 0 : i32
    %c0_i32_1 = arith.constant 0 : i32
    return %arg0, %c0_i32, %c0_i32_0 : i32, i32, i32
  }
  func.func @transform_1(%arg0: i32) -> (i32, i32) {
    %c0_i32 = arith.constant 0 : i32
    %c0_i32_0 = arith.constant 0 : i32
    %c0_i32_1 = arith.constant 0 : i32
    return %c0_i32, %c0_i32_0 : i32, i32
  }
  func.func @transform_2(%arg0: i32) -> (i32, i32) {
    %c0_i32 = arith.constant 0 : i32
    %c0_i32_0 = arith.constant 0 : i32
    %c0_i32_1 = arith.constant 0 : i32
    return %c0_i32, %c0_i32_0 : i32, i32
  }
  func.func @transform_3(%arg0: i32) -> (i32, i32) {
    %c0_i32 = arith.constant 0 : i32
    %c0_i32_0 = arith.constant 0 : i32
    %c0_i32_1 = arith.constant 0 : i32
    return %c0_i32, %c0_i32_0 : i32, i32
  }
  func.func @transform_4(%arg0: i32) -> (i32, i32) {
    %c0_i32 = arith.constant 0 : i32
    %c0_i32_0 = arith.constant 0 : i32
    %c0_i32_1 = arith.constant 0 : i32
    return %c0_i32, %c0_i32_0 : i32, i32
  }
  func.func @transform_5(%arg0: i32) -> (i32, i32, i32) {
    %c0_i32 = arith.constant 0 : i32
    %c0_i32_0 = arith.constant 0 : i32
    %c0_i32_1 = arith.constant 0 : i32
    return %arg0, %c0_i32, %c0_i32_0 : i32, i32, i32
  }
}

</mosaic_0001>

<llo_original>
// kernel: tpu_custom_call.1
$region0: #{tpu_custom_call.1}
  #allocation0 [shape = 'u32[]', space=smem, size = 0x4, offset = 0x4, fixed_abs, tag = 'smem constant byte address 0x4 - core index']
  #allocation1 [shape = 'u32[144,128]{1,0:T(1,128)}', space=vmem, size = 0x12000, scoped, tag = 'internal scratch']
  %s0 = inlined_call_operand.vmem [shape: bf16[1,1,512], index: 0, kind: input, shape index: {}]
  %s1 = inlined_call_operand.vmem [shape: bf16[512,8], index: 1, kind: input, shape index: {}]
  %s2 = inlined_call_operand.vmem [shape: f32[32,4], index: 2, kind: input, shape index: {}]
  %s3 = inlined_call_operand.vmem [shape: bf16[32,32], index: 3, kind: input, shape index: {}]
  %s4 = inlined_call_operand.vmem [shape: bf16[16,32], index: 4, kind: input, shape index: {}]
  %s5 = inlined_call_operand.vmem [shape: f32[1,16,8], index: 5, kind: output, shape index: {}]
  %s6 = sld [smem:[#allocation0]]
  $region30: #{tpu_custom_call.1} parent=0
    _
  %s8 = ssub.s32 1, %s6
  %s9 = scalar_select 0, %s8, %s6
  // Predicated region
  $region2: #{tpu_custom_call.1} parent=0 // pred_check
    _
  $region3: #{tpu_custom_call.1} parent=0 // pred_check_branch
    %11 = sbr.rel (0) target = $region5
  $region4: #{tpu_custom_call.1} parent=0 // pred_region
    _
  $region5: #{tpu_custom_call.1} parent=0 // pred_fallthru
    _
  // Predicated region
  $region6: #{tpu_custom_call.1} parent=0 // pred_check
    _
  $region7: #{tpu_custom_call.1} parent=0 // pred_check_branch
    %13 = sbr.rel (0) target = $region9
  $region8: #{tpu_custom_call.1} parent=0 // pred_region
    _
  $region9: #{tpu_custom_call.1} parent=0 // pred_fallthru
    _
  // Predicated region
  $region10: #{tpu_custom_call.1} parent=0 // pred_check
    _
  $region11: #{tpu_custom_call.1} parent=0 // pred_check_branch
    %15 = sbr.rel (0) target = $region13
  $region12: #{tpu_custom_call.1} parent=0 // pred_region
    _
  $region13: #{tpu_custom_call.1} parent=0 // pred_fallthru
    _
  // Predicated region
  $region14: #{tpu_custom_call.1} parent=0 // pred_check
    _
  $region15: #{tpu_custom_call.1} parent=0 // pred_check_branch
    %17 = sbr.rel (0) target = $region17
  $region16: #{tpu_custom_call.1} parent=0 // pred_region
    _
  $region17: #{tpu_custom_call.1} parent=0 // pred_fallthru
    _
  // Predicated region
  $region18: #{tpu_custom_call.1} parent=0 // pred_check
    _
  $region19: #{tpu_custom_call.1} parent=0 // pred_check_branch
    %19 = sbr.rel (0) target = $region21
  $region20: #{tpu_custom_call.1} parent=0 // pred_region
    _
  $region21: #{tpu_custom_call.1} parent=0 // pred_fallthru
    _
  %v21 = vld [vmem:[%s2] sm:$0xff]
  %v22 = vld [vmem:[%s2 + $0x8] sm:$0xff]
  %v23 = vld [vmem:[%s2 + $0x10] sm:$0xff]
  %v24 = vld [vmem:[%s2 + $0x18] sm:$0xff]
  %v25 = vld [vmem:[%s3] sm:$0xf]
  %v26 = vld [vmem:[%s3 + $0x4] sm:$0xf]
  %v27 = vld [vmem:[%s3 + $0x8] sm:$0xf]
  %v28 = vld [vmem:[%s3 + $0xc] sm:$0xf]
  %v29 = vld [vmem:[%s4] sm:$0xf]
  %v30 = vld [vmem:[%s4 + $0x4] sm:$0xf]
  %v31 = vld [vmem:[%s0] sm:$0xf]
  %v32 = vld [vmem:[%s1] sm:$0xf]
  %v33 = vld [vmem:[%s1 + $0x4] sm:$0xf]
  %v34 = vld [vmem:[%s1 + $0x8] sm:$0xf]
  %v35 = vld [vmem:[%s1 + $0xc] sm:$0xf]
  %v36 = vld [vmem:[%s1 + $0x10] sm:$0xf]
  %v37 = vld [vmem:[%s1 + $0x14] sm:$0xf]
  %v38 = vld [vmem:[%s1 + $0x18] sm:$0xf]
  %v39 = vld [vmem:[%s1 + $0x1c] sm:$0xf]
  %v40 = vld [vmem:[%s1 + $0x20] sm:$0xf]
  %v41 = vld [vmem:[%s1 + $0x24] sm:$0xf]
  %v42 = vld [vmem:[%s1 + $0x28] sm:$0xf]
  %v43 = vld [vmem:[%s1 + $0x2c] sm:$0xf]
  %v44 = vld [vmem:[%s1 + $0x30] sm:$0xf]
  %v45 = vld [vmem:[%s1 + $0x34] sm:$0xf]
  %v46 = vld [vmem:[%s1 + $0x38] sm:$0xf]
  %v47 = vld [vmem:[%s1 + $0x3c] sm:$0xf]
  %v48 = vld [vmem:[%s1 + $0x40] sm:$0xf]
  %v49 = vld [vmem:[%s1 + $0x44] sm:$0xf]
  %v50 = vld [vmem:[%s1 + $0x48] sm:$0xf]
  %v51 = vld [vmem:[%s1 + $0x4c] sm:$0xf]
  %v52 = vld [vmem:[%s1 + $0x50] sm:$0xf]
  %v53 = vld [vmem:[%s1 + $0x54] sm:$0xf]
  %v54 = vld [vmem:[%s1 + $0x58] sm:$0xf]
  %v55 = vld [vmem:[%s1 + $0x5c] sm:$0xf]
  %v56 = vld [vmem:[%s1 + $0x60] sm:$0xf]
  %v57 = vld [vmem:[%s1 + $0x64] sm:$0xf]
  %v58 = vld [vmem:[%s1 + $0x68] sm:$0xf]
  %v59 = vld [vmem:[%s1 + $0x6c] sm:$0xf]
  %v60 = vld [vmem:[%s1 + $0x70] sm:$0xf]
  %v61 = vld [vmem:[%s1 + $0x74] sm:$0xf]
  %v62 = vld [vmem:[%s1 + $0x78] sm:$0xf]
  %v63 = vld [vmem:[%s1 + $0x7c] sm:$0xf]
  %v64 = vld [vmem:[%s1 + $0x80] sm:$0xf]
  %v65 = vld [vmem:[%s1 + $0x84] sm:$0xf]
  %v66 = vld [vmem:[%s1 + $0x88] sm:$0xf]
  %v67 = vld [vmem:[%s1 + $0x8c] sm:$0xf]
  %v68 = vld [vmem:[%s1 + $0x90] sm:$0xf]
  %v69 = vld [vmem:[%s1 + $0x94] sm:$0xf]
  %v70 = vld [vmem:[%s1 + $0x98] sm:$0xf]
  %v71 = vld [vmem:[%s1 + $0x9c] sm:$0xf]
  %v72 = vld [vmem:[%s1 + $0xa0] sm:$0xf]
  %v73 = vld [vmem:[%s1 + $0xa4] sm:$0xf]
  %v74 = vld [vmem:[%s1 + $0xa8] sm:$0xf]
  %v75 = vld [vmem:[%s1 + $0xac] sm:$0xf]
  %v76 = vld [vmem:[%s1 + $0xb0] sm:$0xf]
  %v77 = vld [vmem:[%s1 + $0xb4] sm:$0xf]
  %v78 = vld [vmem:[%s1 + $0xb8] sm:$0xf]
  %v79 = vld [vmem:[%s1 + $0xbc] sm:$0xf]
  %v80 = vld [vmem:[%s1 + $0xc0] sm:$0xf]
  %v81 = vld [vmem:[%s1 + $0xc4] sm:$0xf]
  %v82 = vld [vmem:[%s1 + $0xc8] sm:$0xf]
  %v83 = vld [vmem:[%s1 + $0xcc] sm:$0xf]
  %v84 = vld [vmem:[%s1 + $0xd0] sm:$0xf]
  %v85 = vld [vmem:[%s1 + $0xd4] sm:$0xf]
  %v86 = vld [vmem:[%s1 + $0xd8] sm:$0xf]
  %v87 = vld [vmem:[%s1 + $0xdc] sm:$0xf]
  %v88 = vld [vmem:[%s1 + $0xe0] sm:$0xf]
  %v89 = vld [vmem:[%s1 + $0xe4] sm:$0xf]
  %v90 = vld [vmem:[%s1 + $0xe8] sm:$0xf]
  %v91 = vld [vmem:[%s1 + $0xec] sm:$0xf]
  %v92 = vld [vmem:[%s1 + $0xf0] sm:$0xf]
  %v93 = vld [vmem:[%s1 + $0xf4] sm:$0xf]
  %v94 = vld [vmem:[%s1 + $0xf8] sm:$0xf]
  %v95 = vld [vmem:[%s1 + $0xfc] sm:$0xf]
  %v96 = vunpack.c.l.bf16 %v31
  %98 = vset.pattern.permute.xlu0 0
  %99 = vperm.xlu0 %98, %v21
  %v100 = vpop.permute.xlu0 %99
  %103 = vset.pattern.permute.xlu0 0
  %104 = vperm.xlu0 %103, %v22
  %v105 = vpop.permute.xlu0 %104
  %108 = vset.pattern.permute.xlu0 0
  %109 = vperm.xlu0 %108, %v23
  %v110 = vpop.permute.xlu0 %109
  %113 = vset.pattern.permute.xlu0 0
  %114 = vperm.xlu0 %113, %v24
  %v115 = vpop.permute.xlu0 %114
  %v118 = vlaneseq
  %v119 = vshrl.u32 %v118, 7
  %v120 = vsub.s32 0, %v119
  %v121 = vrot.slane %v96, %v120
  %v122 = vlaneseq
  %v123 = vshrl.u32 %v122, 7
  %v124 = vsub.s32 2, %v123
  %v125 = vrot.slane %v96, %v124
  %v126 = vlaneseq
  %v127 = vshrl.u32 %v126, 7
  %v128 = vsub.s32 4, %v127
  %v129 = vrot.slane %v96, %v128
  %v130 = vlaneseq
  %v131 = vshrl.u32 %v130, 7
  %v132 = vsub.s32 6, %v131
  %v133 = vrot.slane %v96, %v132
  %v138 = vlaneseq
  %v139 = vshrl.u32 %v138, 7
  %v140 = vsub.s32 0, %v139
  %v141 = vrot.slane %v121, %v140
  %v142 = vlaneseq
  %v143 = vshrl.u32 %v142, 7
  %v144 = vsub.s32 0, %v143
  %v145 = vrot.slane %v125, %v144
  %v146 = vlaneseq
  %v147 = vshrl.u32 %v146, 7
  %v148 = vsub.s32 0, %v147
  %v149 = vrot.slane %v129, %v148
  %v150 = vlaneseq
  %v151 = vshrl.u32 %v150, 7
  %v152 = vsub.s32 0, %v151
  %v153 = vrot.slane %v133, %v152
  %v154 = vmul.f32 %v100, %v141
  %v155 = vmul.f32 %v100, %v145
  %v156 = vmul.f32 %v100, %v149
  %v157 = vmul.f32 %v100, %v153
  %v158 = vmul.f32 %v105, %v141
  %v159 = vmul.f32 %v105, %v145
  %v160 = vmul.f32 %v105, %v149
  %v161 = vmul.f32 %v105, %v153
  %v162 = vmul.f32 %v110, %v141
  %v163 = vmul.f32 %v110, %v145
  %v164 = vmul.f32 %v110, %v149
  %v165 = vmul.f32 %v110, %v153
  %v166 = vmul.f32 %v115, %v141
  %v167 = vmul.f32 %v115, %v145
  %v168 = vmul.f32 %v115, %v149
  %v169 = vmul.f32 %v115, %v153
  %170 = vset.pattern.permute.xlu0 1
  %171 = vperm.xlu0 %170, %v21
  %v172 = vpop.permute.xlu0 %171
  %174 = vset.pattern.permute.xlu0 1
  %175 = vperm.xlu0 %174, %v22
  %v176 = vpop.permute.xlu0 %175
  %178 = vset.pattern.permute.xlu0 1
  %179 = vperm.xlu0 %178, %v23
  %v180 = vpop.permute.xlu0 %179
  %182 = vset.pattern.permute.xlu0 1
  %183 = vperm.xlu0 %182, %v24
  %v184 = vpop.permute.xlu0 %183
  %v186 = vadd.f32 %v154, %v172
  %v187 = vadd.f32 %v155, %v172
  %v188 = vadd.f32 %v156, %v172
  %v189 = vadd.f32 %v157, %v172
  %v190 = vadd.f32 %v158, %v176
  %v191 = vadd.f32 %v159, %v176
  %v192 = vadd.f32 %v160, %v176
  %v193 = vadd.f32 %v161, %v176
  %v194 = vadd.f32 %v162, %v180
  %v195 = vadd.f32 %v163, %v180
  %v196 = vadd.f32 %v164, %v180
  %v197 = vadd.f32 %v165, %v180
  %v198 = vadd.f32 %v166, %v184
  %v199 = vadd.f32 %v167, %v184
  %v200 = vadd.f32 %v168, %v184
  %v201 = vadd.f32 %v169, %v184
  %v202 = vmax.f32 %v186, 0.0
  %v203 = vmax.f32 %v187, 0.0
  %v204 = vmax.f32 %v188, 0.0
  %v205 = vmax.f32 %v189, 0.0
  %v206 = vmax.f32 %v190, 0.0
  %v207 = vmax.f32 %v191, 0.0
  %v208 = vmax.f32 %v192, 0.0
  %v209 = vmax.f32 %v193, 0.0
  %v210 = vmax.f32 %v194, 0.0
  %v211 = vmax.f32 %v195, 0.0
  %v212 = vmax.f32 %v196, 0.0
  %v213 = vmax.f32 %v197, 0.0
  %v214 = vmax.f32 %v198, 0.0
  %v215 = vmax.f32 %v199, 0.0
  %v216 = vmax.f32 %v200, 0.0
  %v217 = vmax.f32 %v201, 0.0
  %v218 = vpack.c.bf16 %v206, %v202
  %v219 = vpack.c.bf16 %v207, %v203
  %v220 = vpack.c.bf16 %v208, %v204
  %v221 = vpack.c.bf16 %v209, %v205
  %v222 = vpack.c.bf16 %v214, %v210
  %v223 = vpack.c.bf16 %v215, %v211
  %v224 = vpack.c.bf16 %v216, %v212
  %v225 = vpack.c.bf16 %v217, %v213
  %226 = vset.pattern.permute.xlu0 2
  %227 = vperm.xlu0 %226, %v21
  %v228 = vpop.permute.xlu0 %227
  %230 = vset.pattern.permute.xlu0 2
  %231 = vperm.xlu0 %230, %v22
  %v232 = vpop.permute.xlu0 %231
  %234 = vset.pattern.permute.xlu0 2
  %235 = vperm.xlu0 %234, %v23
  %v236 = vpop.permute.xlu0 %235
  %238 = vset.pattern.permute.xlu0 2
  %239 = vperm.xlu0 %238, %v24
  %v240 = vpop.permute.xlu0 %239
  %v246 = vunpack.c.l.b16 %v25
  %v247 = vunpack.c.l.b16 %v26
  %v248 = vunpack.c.l.b16 %v27
  %v249 = vunpack.c.l.b16 %v28
  %v250 = vpack.c.b16 %v247, %v246
  %v251 = vpack.c.b16 %v249, %v248
  %vm252 = vcmask 261120
  %v254 = vsel %vm252, %v250, 0
  %v257 = vsel %vm252, %v251, 0
  %259 = vmatprep.subr.bf16.mxu0 %v219
  %260 = vmatpush1.bf16.msra.mxu0 %v218
  %261 = vmatprep.subr.bf16.mxu0 %v223
  %262 = vmatpush1.bf16.msra.mxu0 %v222
  %263 = vmatprep.subr.bf16.mxu0 0
  %264 = vmatpush1.bf16.msra.mxu0 0
  %265 = vmatprep.subr.bf16.mxu0 0
  %266 = vmatpush1.bf16.msra.mxu0 0
  %267 = vmatprep.subr.bf16.mxu0 0
  %268 = vmatpush1.bf16.msra.mxu0 0
  %269 = vmatprep.subr.bf16.mxu0 0
  %270 = vmatpush1.bf16.msra.mxu0 0
  %271 = vmatprep.subr.bf16.mxu0 0
  %272 = vmatpush1.bf16.msra.mxu0 0
  %273 = vmatprep.subr.bf16.mxu0 0
  %274 = vmatpush1.bf16.msra.mxu0 0
  %275 = vmatprep.subr.bf16.mxu0 0
  %276 = vmatpush1.bf16.msra.mxu0 0
  %277 = vmatprep.subr.bf16.mxu0 0
  %278 = vmatpush1.bf16.msra.mxu0 0
  %279 = vmatprep.subr.bf16.mxu0 0
  %280 = vmatpush1.bf16.msra.mxu0 0
  %281 = vmatprep.subr.bf16.mxu0 0
  %282 = vmatpush1.bf16.msra.mxu0 0
  %283 = vmatprep.subr.bf16.mxu0 0
  %284 = vmatpush1.bf16.msra.mxu0 0
  %285 = vmatprep.subr.bf16.mxu0 0
  %286 = vmatpush1.bf16.msra.mxu0 0
  %287 = vmatprep.subr.bf16.mxu0 0
  %288 = vmatpush1.bf16.msra.mxu0 0
  %289 = vmatprep.subr.bf16.mxu0 0
  %290 = vmatpush1.bf16.msra.mxu0 0
  %291 = vmatprep.mubr.bf16.mxu0 0
  %292 = vmatmul.mubr.bf16.gmra.mrb[0].mxu0 %v254
  %v293 = vpop.f32.mrb[0].mxu0
  %v294 = vadd.f32 %v228, %v293
  %v295 = vpop.f32.mrb[0].mxu0
  %v296 = vadd.f32 %v228, %v295
  %v297 = vpop.f32.mrb[0].mxu0
  %v298 = vadd.f32 %v232, %v297
  %v299 = vpop.f32.mrb[0].mxu0
  %v300 = vadd.f32 %v232, %v299
  %301 = vmatprep.mubr.bf16.mxu0 0
  %302 = vmatmul.mubr.bf16.gmra.mrb[0].mxu0 %v257
  %v303 = vpop.f32.mrb[0].mxu0
  %v304 = vadd.f32 %v236, %v303
  %v305 = vpop.f32.mrb[0].mxu0
  %v306 = vadd.f32 %v236, %v305
  %v307 = vpop.f32.mrb[0].mxu0
  %v308 = vadd.f32 %v240, %v307
  %v309 = vpop.f32.mrb[0].mxu0
  %v310 = vadd.f32 %v240, %v309
  %311 = vdwg.mxu0
  %312 = vmatprep.subr.bf16.mxu0 %v221
  %313 = vmatpush1.bf16.msra.mxu0 %v220
  %314 = vmatprep.subr.bf16.mxu0 %v225
  %315 = vmatpush1.bf16.msra.mxu0 %v224
  %316 = vmatprep.subr.bf16.mxu0 0
  %317 = vmatpush1.bf16.msra.mxu0 0
  %318 = vmatprep.subr.bf16.mxu0 0
  %319 = vmatpush1.bf16.msra.mxu0 0
  %320 = vmatprep.subr.bf16.mxu0 0
  %321 = vmatpush1.bf16.msra.mxu0 0
  %322 = vmatprep.subr.bf16.mxu0 0
  %323 = vmatpush1.bf16.msra.mxu0 0
  %324 = vmatprep.subr.bf16.mxu0 0
  %325 = vmatpush1.bf16.msra.mxu0 0
  %326 = vmatprep.subr.bf16.mxu0 0
  %327 = vmatpush1.bf16.msra.mxu0 0
  %328 = vmatprep.subr.bf16.mxu0 0
  %329 = vmatpush1.bf16.msra.mxu0 0
  %330 = vmatprep.subr.bf16.mxu0 0
  %331 = vmatpush1.bf16.msra.mxu0 0
  %332 = vmatprep.subr.bf16.mxu0 0
  %333 = vmatpush1.bf16.msra.mxu0 0
  %334 = vmatprep.subr.bf16.mxu0 0
  %335 = vmatpush1.bf16.msra.mxu0 0
  %336 = vmatprep.subr.bf16.mxu0 0
  %337 = vmatpush1.bf16.msra.mxu0 0
  %338 = vmatprep.subr.bf16.mxu0 0
  %339 = vmatpush1.bf16.msra.mxu0 0
  %340 = vmatprep.subr.bf16.mxu0 0
  %341 = vmatpush1.bf16.msra.mxu0 0
  %342 = vmatprep.subr.bf16.mxu0 0
  %343 = vmatpush1.bf16.msra.mxu0 0
  %344 = vmatprep.mubr.bf16.mxu0 0
  %345 = vmatmul.mubr.bf16.gmra.mrb[0].mxu0 %v254
  %v346 = vpop.f32.mrb[0].mxu0
  %v347 = vadd.f32 %v228, %v346
  %v348 = vpop.f32.mrb[0].mxu0
  %v349 = vadd.f32 %v228, %v348
  %v350 = vpop.f32.mrb[0].mxu0
  %v351 = vadd.f32 %v232, %v350
  %v352 = vpop.f32.mrb[0].mxu0
  %v353 = vadd.f32 %v232, %v352
  %354 = vmatprep.mubr.bf16.mxu0 0
  %355 = vmatmul.mubr.bf16.gmra.mrb[0].mxu0 %v257
  %v356 = vpop.f32.mrb[0].mxu0
  %v357 = vadd.f32 %v236, %v356
  %v358 = vpop.f32.mrb[0].mxu0
  %v359 = vadd.f32 %v236, %v358
  %v360 = vpop.f32.mrb[0].mxu0
  %v361 = vadd.f32 %v240, %v360
  %v362 = vpop.f32.mrb[0].mxu0
  %v363 = vadd.f32 %v240, %v362
  %364 = vdwg.mxu0
  %v365 = vmax.f32 %v294, 0.0
  %v366 = vmax.f32 %v296, 0.0
  %v367 = vmax.f32 %v347, 0.0
  %v368 = vmax.f32 %v349, 0.0
  %v369 = vmax.f32 %v298, 0.0
  %v370 = vmax.f32 %v300, 0.0
  %v371 = vmax.f32 %v351, 0.0
  %v372 = vmax.f32 %v353, 0.0
  %v373 = vmax.f32 %v304, 0.0
  %v374 = vmax.f32 %v306, 0.0
  %v375 = vmax.f32 %v357, 0.0
  %v376 = vmax.f32 %v359, 0.0
  %v377 = vmax.f32 %v308, 0.0
  %v378 = vmax.f32 %v310, 0.0
  %v379 = vmax.f32 %v361, 0.0
  %v380 = vmax.f32 %v363, 0.0
  %v381 = vpack.c.bf16 %v369, %v365
  %v382 = vpack.c.bf16 %v370, %v366
  %v383 = vpack.c.bf16 %v371, %v367
  %v384 = vpack.c.bf16 %v372, %v368
  %v385 = vpack.c.bf16 %v377, %v373
  %v386 = vpack.c.bf16 %v378, %v374
  %v387 = vpack.c.bf16 %v379, %v375
  %v388 = vpack.c.bf16 %v380, %v376
  %389 = vset.pattern.permute.xlu0 3
  %390 = vperm.xlu0 %389, %v21
  %v391 = vpop.permute.xlu0 %390
  %393 = vset.pattern.permute.xlu0 3
  %394 = vperm.xlu0 %393, %v22
  %v395 = vpop.permute.xlu0 %394
  %v399 = vunpack.c.l.b16 %v29
  %v400 = vunpack.c.l.b16 %v30
  %v401 = vpack.c.b16 %v400, %v399
  %v403 = vsel %vm252, %v401, 0
  %405 = vmatprep.subr.bf16.mxu0 %v382
  %406 = vmatpush1.bf16.msra.mxu0 %v381
  %407 = vmatprep.subr.bf16.mxu0 %v386
  %408 = vmatpush1.bf16.msra.mxu0 %v385
  %409 = vmatprep.subr.bf16.mxu0 0
  %410 = vmatpush1.bf16.msra.mxu0 0
  %411 = vmatprep.subr.bf16.mxu0 0
  %412 = vmatpush1.bf16.msra.mxu0 0
  %413 = vmatprep.subr.bf16.mxu0 0
  %414 = vmatpush1.bf16.msra.mxu0 0
  %415 = vmatprep.subr.bf16.mxu0 0
  %416 = vmatpush1.bf16.msra.mxu0 0
  %417 = vmatprep.subr.bf16.mxu0 0
  %418 = vmatpush1.bf16.msra.mxu0 0
  %419 = vmatprep.subr.bf16.mxu0 0
  %420 = vmatpush1.bf16.msra.mxu0 0
  %421 = vmatprep.subr.bf16.mxu0 0
  %422 = vmatpush1.bf16.msra.mxu0 0
  %423 = vmatprep.subr.bf16.mxu0 0
  %424 = vmatpush1.bf16.msra.mxu0 0
  %425 = vmatprep.subr.bf16.mxu0 0
  %426 = vmatpush1.bf16.msra.mxu0 0
  %427 = vmatprep.subr.bf16.mxu0 0
  %428 = vmatpush1.bf16.msra.mxu0 0
  %429 = vmatprep.subr.bf16.mxu0 0
  %430 = vmatpush1.bf16.msra.mxu0 0
  %431 = vmatprep.subr.bf16.mxu0 0
  %432 = vmatpush1.bf16.msra.mxu0 0
  %433 = vmatprep.subr.bf16.mxu0 0
  %434 = vmatpush1.bf16.msra.mxu0 0
  %435 = vmatprep.subr.bf16.mxu0 0
  %436 = vmatpush1.bf16.msra.mxu0 0
  %437 = vmatprep.mubr.bf16.mxu0 0
  %438 = vmatmul.mubr.bf16.gmra.mrb[0].mxu0 %v403
  %v439 = vpop.f32.mrb[0].mxu0
  %v440 = vadd.f32 %v391, %v439
  %v441 = vpop.f32.mrb[0].mxu0
  %v442 = vadd.f32 %v391, %v441
  %v443 = vpop.f32.mrb[0].mxu0
  %v444 = vadd.f32 %v395, %v443
  %v445 = vpop.f32.mrb[0].mxu0
  %v446 = vadd.f32 %v395, %v445
  %447 = vdwg.mxu0
  %448 = vmatprep.subr.bf16.mxu0 %v384
  %449 = vmatpush1.bf16.msra.mxu0 %v383
  %450 = vmatprep.subr.bf16.mxu0 %v388
  %451 = vmatpush1.bf16.msra.mxu0 %v387
  %452 = vmatprep.subr.bf16.mxu0 0
  %453 = vmatpush1.bf16.msra.mxu0 0
  %454 = vmatprep.subr.bf16.mxu0 0
  %455 = vmatpush1.bf16.msra.mxu0 0
  %456 = vmatprep.subr.bf16.mxu0 0
  %457 = vmatpush1.bf16.msra.mxu0 0
  %458 = vmatprep.subr.bf16.mxu0 0
  %459 = vmatpush1.bf16.msra.mxu0 0
  %460 = vmatprep.subr.bf16.mxu0 0
  %461 = vmatpush1.bf16.msra.mxu0 0
  %462 = vmatprep.subr.bf16.mxu0 0
  %463 = vmatpush1.bf16.msra.mxu0 0
  %464 = vmatprep.subr.bf16.mxu0 0
  %465 = vmatpush1.bf16.msra.mxu0 0
  %466 = vmatprep.subr.bf16.mxu0 0
  %467 = vmatpush1.bf16.msra.mxu0 0
  %468 = vmatprep.subr.bf16.mxu0 0
  %469 = vmatpush1.bf16.msra.mxu0 0
  %470 = vmatprep.subr.bf16.mxu0 0
  %471 = vmatpush1.bf16.msra.mxu0 0
  %472 = vmatprep.subr.bf16.mxu0 0
  %473 = vmatpush1.bf16.msra.mxu0 0
  %474 = vmatprep.subr.bf16.mxu0 0
  %475 = vmatpush1.bf16.msra.mxu0 0
  %476 = vmatprep.subr.bf16.mxu0 0
  %477 = vmatpush1.bf16.msra.mxu0 0
  %478 = vmatprep.subr.bf16.mxu0 0
  %479 = vmatpush1.bf16.msra.mxu0 0
  %480 = vmatprep.mubr.bf16.mxu0 0
  %481 = vmatmul.mubr.bf16.gmra.mrb[0].mxu0 %v403
  %v482 = vpop.f32.mrb[0].mxu0
  %v483 = vadd.f32 %v391, %v482
  %v484 = vpop.f32.mrb[0].mxu0
  %v485 = vadd.f32 %v391, %v484
  %v486 = vpop.f32.mrb[0].mxu0
  %v487 = vadd.f32 %v395, %v486
  %v488 = vpop.f32.mrb[0].mxu0
  %v489 = vadd.f32 %v395, %v488
  %490 = vdwg.mxu0
  %v491 = vpack.c.bf16 %v444, %v440
  %v492 = vpack.c.bf16 %v446, %v442
  %v493 = vpack.c.bf16 %v487, %v483
  %v494 = vpack.c.bf16 %v489, %v485
  %v559 = vunpack.c.l.b16 %v32
  %v560 = vunpack.c.l.b16 %v33
  %v561 = vunpack.c.l.b16 %v34
  %v562 = vunpack.c.l.b16 %v35
  %v563 = vunpack.c.l.b16 %v36
  %v564 = vunpack.c.l.b16 %v37
  %v565 = vunpack.c.l.b16 %v38
  %v566 = vunpack.c.l.b16 %v39
  %v567 = vunpack.c.l.b16 %v40
  %v568 = vunpack.c.l.b16 %v41
  %v569 = vunpack.c.l.b16 %v42
  %v570 = vunpack.c.l.b16 %v43
  %v571 = vunpack.c.l.b16 %v44
  %v572 = vunpack.c.l.b16 %v45
  %v573 = vunpack.c.l.b16 %v46
  %v574 = vunpack.c.l.b16 %v47
  %v575 = vunpack.c.l.b16 %v48
  %v576 = vunpack.c.l.b16 %v49
  %v577 = vunpack.c.l.b16 %v50
  %v578 = vunpack.c.l.b16 %v51
  %v579 = vunpack.c.l.b16 %v52
  %v580 = vunpack.c.l.b16 %v53
  %v581 = vunpack.c.l.b16 %v54
  %v582 = vunpack.c.l.b16 %v55
  %v583 = vunpack.c.l.b16 %v56
  %v584 = vunpack.c.l.b16 %v57
  %v585 = vunpack.c.l.b16 %v58
  %v586 = vunpack.c.l.b16 %v59
  %v587 = vunpack.c.l.b16 %v60
  %v588 = vunpack.c.l.b16 %v61
  %v589 = vunpack.c.l.b16 %v62
  %v590 = vunpack.c.l.b16 %v63
  %v591 = vunpack.c.l.b16 %v64
  %v592 = vunpack.c.l.b16 %v65
  %v593 = vunpack.c.l.b16 %v66
  %v594 = vunpack.c.l.b16 %v67
  %v595 = vunpack.c.l.b16 %v68
  %v596 = vunpack.c.l.b16 %v69
  %v597 = vunpack.c.l.b16 %v70
  %v598 = vunpack.c.l.b16 %v71
  %v599 = vunpack.c.l.b16 %v72
  %v600 = vunpack.c.l.b16 %v73
  %v601 = vunpack.c.l.b16 %v74
  %v602 = vunpack.c.l.b16 %v75
  %v603 = vunpack.c.l.b16 %v76
  %v604 = vunpack.c.l.b16 %v77
  %v605 = vunpack.c.l.b16 %v78
  %v606 = vunpack.c.l.b16 %v79
  %v607 = vunpack.c.l.b16 %v80
  %v608 = vunpack.c.l.b16 %v81
  %v609 = vunpack.c.l.b16 %v82
  %v610 = vunpack.c.l.b16 %v83
  %v611 = vunpack.c.l.b16 %v84
  %v612 = vunpack.c.l.b16 %v85
  %v613 = vunpack.c.l.b16 %v86
  %v614 = vunpack.c.l.b16 %v87
  %v615 = vunpack.c.l.b16 %v88
  %v616 = vunpack.c.l.b16 %v89
  %v617 = vunpack.c.l.b16 %v90
  %v618 = vunpack.c.l.b16 %v91
  %v619 = vunpack.c.l.b16 %v92
  %v620 = vunpack.c.l.b16 %v93
  %v621 = vunpack.c.l.b16 %v94
  %v622 = vunpack.c.l.b16 %v95
  %v623 = vpack.c.b16 %v560, %v559
  %v624 = vpack.c.b16 %v562, %v561
  %v625 = vpack.c.b16 %v564, %v563
  %v626 = vpack.c.b16 %v566, %v565
  %v627 = vpack.c.b16 %v568, %v567
  %v628 = vpack.c.b16 %v570, %v569
  %v629 = vpack.c.b16 %v572, %v571
  %v630 = vpack.c.b16 %v574, %v573
  %v631 = vpack.c.b16 %v576, %v575
  %v632 = vpack.c.b16 %v578, %v577
  %v633 = vpack.c.b16 %v580, %v579
  %v634 = vpack.c.b16 %v582, %v581
  %v635 = vpack.c.b16 %v584, %v583
  %v636 = vpack.c.b16 %v586, %v585
  %v637 = vpack.c.b16 %v588, %v587
  %v638 = vpack.c.b16 %v590, %v589
  %v639 = vpack.c.b16 %v592, %v591
  %v640 = vpack.c.b16 %v594, %v593
  %v641 = vpack.c.b16 %v596, %v595
  %v642 = vpack.c.b16 %v598, %v597
  %v643 = vpack.c.b16 %v600, %v599
  %v644 = vpack.c.b16 %v602, %v601
  %v645 = vpack.c.b16 %v604, %v603
  %v646 = vpack.c.b16 %v606, %v605
  %v647 = vpack.c.b16 %v608, %v607
  %v648 = vpack.c.b16 %v610, %v609
  %v649 = vpack.c.b16 %v612, %v611
  %v650 = vpack.c.b16 %v614, %v613
  %v651 = vpack.c.b16 %v616, %v615
  %v652 = vpack.c.b16 %v618, %v617
  %v653 = vpack.c.b16 %v620, %v619
  %v654 = vpack.c.b16 %v622, %v621
  %687 = vmatprep.subr.bf16.mxu0 0
  %688 = vmatpush1.bf16.msra.mxu0 %v623
  %689 = vmatprep.subr.bf16.mxu0 0
  %690 = vmatpush1.bf16.msra.mxu0 %v624
  %691 = vmatprep.subr.bf16.mxu0 0
  %692 = vmatpush1.bf16.msra.mxu0 %v625
  %693 = vmatprep.subr.bf16.mxu0 0
  %694 = vmatpush1.bf16.msra.mxu0 %v626
  %695 = vmatprep.subr.bf16.mxu0 0
  %696 = vmatpush1.bf16.msra.mxu0 %v627
  %697 = vmatprep.subr.bf16.mxu0 0
  %698 = vmatpush1.bf16.msra.mxu0 %v628
  %699 = vmatprep.subr.bf16.mxu0 0
  %700 = vmatpush1.bf16.msra.mxu0 %v629
  %701 = vmatprep.subr.bf16.mxu0 0
  %702 = vmatpush1.bf16.msra.mxu0 %v630
  %703 = vmatprep.subr.bf16.mxu0 0
  %704 = vmatpush1.bf16.msra.mxu0 %v631
  %705 = vmatprep.subr.bf16.mxu0 0
  %706 = vmatpush1.bf16.msra.mxu0 %v632
  %707 = vmatprep.subr.bf16.mxu0 0
  %708 = vmatpush1.bf16.msra.mxu0 %v633
  %709 = vmatprep.subr.bf16.mxu0 0
  %710 = vmatpush1.bf16.msra.mxu0 %v634
  %711 = vmatprep.subr.bf16.mxu0 0
  %712 = vmatpush1.bf16.msra.mxu0 %v635
  %713 = vmatprep.subr.bf16.mxu0 0
  %714 = vmatpush1.bf16.msra.mxu0 %v636
  %715 = vmatprep.subr.bf16.mxu0 0
  %716 = vmatpush1.bf16.msra.mxu0 %v637
  %717 = vmatprep.subr.bf16.mxu0 0
  %718 = vmatpush1.bf16.msra.mxu0 %v638
  %719 = vmatprep.mubr.bf16.mxu0 %v492
  %720 = vmatmul.mubr.bf16.gmra.mrb[0].mxu0 %v491
  %v721 = vpop.f32.mrb[0].mxu0
  %v722 = vadd.f32 0.0, %v721
  %v723 = vpop.f32.mrb[0].mxu0
  %v724 = vpop.f32.mrb[0].mxu0
  %v725 = vadd.f32 0.0, %v724
  %v726 = vpop.f32.mrb[0].mxu0
  %727 = vdwg.mxu0
  %728 = vmatprep.subr.bf16.mxu0 0
  %729 = vmatpush1.bf16.msra.mxu0 %v639
  %730 = vmatprep.subr.bf16.mxu0 0
  %731 = vmatpush1.bf16.msra.mxu0 %v640
  %732 = vmatprep.subr.bf16.mxu0 0
  %733 = vmatpush1.bf16.msra.mxu0 %v641
  %734 = vmatprep.subr.bf16.mxu0 0
  %735 = vmatpush1.bf16.msra.mxu0 %v642
  %736 = vmatprep.subr.bf16.mxu0 0
  %737 = vmatpush1.bf16.msra.mxu0 %v643
  %738 = vmatprep.subr.bf16.mxu0 0
  %739 = vmatpush1.bf16.msra.mxu0 %v644
  %740 = vmatprep.subr.bf16.mxu0 0
  %741 = vmatpush1.bf16.msra.mxu0 %v645
  %742 = vmatprep.subr.bf16.mxu0 0
  %743 = vmatpush1.bf16.msra.mxu0 %v646
  %744 = vmatprep.subr.bf16.mxu0 0
  %745 = vmatpush1.bf16.msra.mxu0 %v647
  %746 = vmatprep.subr.bf16.mxu0 0
  %747 = vmatpush1.bf16.msra.mxu0 %v648
  %748 = vmatprep.subr.bf16.mxu0 0
  %749 = vmatpush1.bf16.msra.mxu0 %v649
  %750 = vmatprep.subr.bf16.mxu0 0
  %751 = vmatpush1.bf16.msra.mxu0 %v650
  %752 = vmatprep.subr.bf16.mxu0 0
  %753 = vmatpush1.bf16.msra.mxu0 %v651
  %754 = vmatprep.subr.bf16.mxu0 0
  %755 = vmatpush1.bf16.msra.mxu0 %v652
  %756 = vmatprep.subr.bf16.mxu0 0
  %757 = vmatpush1.bf16.msra.mxu0 %v653
  %758 = vmatprep.subr.bf16.mxu0 0
  %759 = vmatpush1.bf16.msra.mxu0 %v654
  %760 = vmatprep.mubr.bf16.mxu0 %v494
  %761 = vmatmul.mubr.bf16.gmra.mrb[0].mxu0 %v493
  %v762 = vpop.f32.mrb[0].mxu0
  %v763 = vadd.f32 %v722, %v762
  %v764 = vpop.f32.mrb[0].mxu0
  %v765 = vpop.f32.mrb[0].mxu0
  %v766 = vadd.f32 %v725, %v765
  %v767 = vpop.f32.mrb[0].mxu0
  %768 = vdwg.mxu0
  %vm769 = vcmask 64512
  %770 = vst.msk [vmem:[%s5] sm:$0xff] %vm769, %v763
  %771 = vst.msk [vmem:[%s5 + $0x8] sm:$0xff] %vm769, %v766
  // Predicated region
  $region22: #{tpu_custom_call.1} parent=0 // pred_check
    _
  $region23: #{tpu_custom_call.1} parent=0 // pred_check_branch
    %773 = sbr.rel (0) target = $region25
  $region24: #{tpu_custom_call.1} parent=0 // pred_region
    _
  $region25: #{tpu_custom_call.1} parent=0 // pred_fallthru
    _
  // Predicated region
  $region26: #{tpu_custom_call.1} parent=0 // pred_check
    _
  $region27: #{tpu_custom_call.1} parent=0 // pred_check_branch
    %775 = sbr.rel (0) target = $region29
  $region28: #{tpu_custom_call.1} parent=0 // pred_region
    _
  $region29: #{tpu_custom_call.1} parent=0 // pred_fallthru
    _

</llo_original>
